<compile_context>
chip_gen: v6e
topology: v6e:2x2x1
jax: 0.10.0
libtpu: 0.0.40
codegen_flags: <defaults>
</compile_context>

<pallas_src>
import functools

import jax
import jax.numpy as jnp
from jax.experimental import pallas as pl
from jax.experimental.pallas import tpu as pltpu


_LANES = 128
_TILE_VMEM_BUDGET = 16 * 1024 * 1024   # 2 inputs x 2 buffers of row tiles
_VMEM_LIMIT_BYTES = 32 * 1024 * 1024   # safe on v5e / v6e / v7x


def _ceil_to(x, m):
    return -(-x // m) * m


def _pick_tile_rows(n_rows, n_cols, itemsize=4, cap=1024):
    """Largest multiple-of-8 row tile s.t. 2 inputs x 2 buffers fit the budget."""
    per_row_bytes = 4 * n_cols * itemsize          # 2 inputs x 2 pipeline buffers
    t = (_TILE_VMEM_BUDGET // max(per_row_bytes, 1)) // 8 * 8
    t = max(8, min(t, cap))
    t = min(t, _ceil_to(n_rows, 8))                # no bigger than (rounded) rows
    return max(t, 8)


# ----------------------------------------------------------------------------
# Kernels (row-gridded, accumulate in SMEM scratch, finalize on last step)
# ----------------------------------------------------------------------------
def _bce_sum_kernel(x_ref, y_ref, out_ref, acc_ref, *, inv_count):
    """BCE-with-logits summed over labeled entries; NaN targets = padding.
    Mean uses the static element count (binary branch semantics)."""
    pid = pl.program_id(0)

    @pl.when(pid == 0)
    def _init():
        acc_ref[0, 0] = jnp.float32(0.0)

    x = x_ref[...].astype(jnp.float32)
    y = y_ref[...].astype(jnp.float32)
    valid = y == y                                  # False where NaN (padding)
    loss = jnp.maximum(x, 0.0) - x * y + jnp.log1p(jnp.exp(-jnp.abs(x)))
    acc_ref[0, 0] += jnp.sum(jnp.where(valid, loss, 0.0))

    @pl.when(pid == pl.num_programs(0) - 1)
    def _fin():
        mean = acc_ref[0, 0] * jnp.float32(inv_count)
        out_ref[...] = jnp.full((1, _LANES), mean, dtype=jnp.float32)


def _masked_bce_kernel(x_ref, y_ref, out_ref, sum_ref, cnt_ref):
    """Multi-label BCE-with-logits averaged over labeled (non-NaN) entries."""
    pid = pl.program_id(0)

    @pl.when(pid == 0)
    def _init():
        sum_ref[0, 0] = jnp.float32(0.0)
        cnt_ref[0, 0] = jnp.float32(0.0)

    x = x_ref[...].astype(jnp.float32)
    y = y_ref[...].astype(jnp.float32)
    labeled = y == y
    # No pre-masking of x/y needed: the final where discards NaN loss entries.
    loss = jnp.maximum(x, 0.0) - x * y + jnp.log1p(jnp.exp(-jnp.abs(x)))
    sum_ref[0, 0] += jnp.sum(jnp.where(labeled, loss, 0.0))
    cnt_ref[0, 0] += jnp.sum(labeled.astype(jnp.float32))

    @pl.when(pid == pl.num_programs(0) - 1)
    def _fin():
        mean = sum_ref[0, 0] / jnp.maximum(cnt_ref[0, 0], jnp.float32(1.0))
        out_ref[...] = jnp.full((1, _LANES), mean, dtype=jnp.float32)


def _cross_entropy_kernel(x_ref, t_ref, out_ref, acc_ref, *, inv_count):
    """mean over rows of (logsumexp(x_i) - x_i[target_i]); target=-1 = padding."""
    pid = pl.program_id(0)

    @pl.when(pid == 0)
    def _init():
        acc_ref[0, 0] = jnp.float32(0.0)

    x = x_ref[...].astype(jnp.float32)              # (T, C)
    t = t_ref[...].astype(jnp.int32)                # (T, 1)
    m = jnp.max(x, axis=-1, keepdims=True)
    lse = m + jnp.log(jnp.sum(jnp.exp(x - m), axis=-1, keepdims=True))
    cols = jax.lax.broadcasted_iota(jnp.int32, x.shape, 1)
    picked = jnp.sum(jnp.where(cols == t, x, 0.0), axis=-1, keepdims=True)
    loss = jnp.where(t >= 0, lse - picked, 0.0)     # zero out padded rows
    acc_ref[0, 0] += jnp.sum(loss)

    @pl.when(pid == pl.num_programs(0) - 1)
    def _fin():
        mean = acc_ref[0, 0] * jnp.float32(inv_count)
        out_ref[...] = jnp.full((1, _LANES), mean, dtype=jnp.float32)


# ----------------------------------------------------------------------------
# pallas_call wrapper: 1-D row grid, resident lane-dense scalar output
# ----------------------------------------------------------------------------
def _reduce_loss_call(kernel, logits, targets, *, tile_rows, n_scratch,
                      transcendentals_per_elem):
    n_rows, n_cols = logits.shape
    t_cols = targets.shape[1]
    grid = (n_rows // tile_rows,)
    elems = n_rows * n_cols
    cost = pl.CostEstimate(
        flops=6 * elems,
        transcendentals=transcendentals_per_elem * elems,
        bytes_accessed=int(logits.size) * logits.dtype.itemsize
        + int(targets.size) * targets.dtype.itemsize + 4,
    )
    out = pl.pallas_call(
        kernel,
        out_shape=jax.ShapeDtypeStruct((1, _LANES), jnp.float32),
        grid_spec=pltpu.PrefetchScalarGridSpec(
            num_scalar_prefetch=0,
            grid=grid,
            in_specs=[
                pl.BlockSpec((tile_rows, n_cols), lambda i: (i, 0)),
                pl.BlockSpec((tile_rows, t_cols), lambda i: (i, 0)),
            ],
            out_specs=pl.BlockSpec((1, _LANES), lambda i: (0, 0)),
            scratch_shapes=[pltpu.SMEM((1, 1), jnp.float32)] * n_scratch,
        ),
        compiler_params=pltpu.CompilerParams(
            dimension_semantics=("arbitrary",),
            vmem_limit_bytes=_VMEM_LIMIT_BYTES,
        ),
        cost_estimate=cost,
    )(logits, targets)
    return out[0, 0]


def _pad_rows(x, n_rows_pad, fill):
    pad = n_rows_pad - x.shape[0]
    if pad == 0:
        return x
    return jnp.pad(x, ((0, pad), (0, 0)), constant_values=fill)


# ----------------------------------------------------------------------------
# Wrapper (mirrors Criterion.forward dispatch; config is static Python)
# ----------------------------------------------------------------------------
@functools.partial(jax.jit, static_argnames=("num_class", "multi_label"))
def criterion_forward(logits, targets, *, num_class, multi_label):
    if num_class == 2 and (not multi_label):
        # ---- binary: lane-dense reshape (N,1)/(N,) -> (rows, 128) -----------
        x = logits.reshape(-1)
        y = targets.reshape(-1)
        if not jnp.issubdtype(y.dtype, jnp.floating):
            y = y.astype(jnp.float32)              # NaN padding needs a float dtype
        n = x.shape[0]
        rows = -(-n // _LANES)
        tile = _pick_tile_rows(rows, _LANES)
        rows_pad = _ceil_to(rows, tile)
        total = rows_pad * _LANES
        x = jnp.pad(x, (0, total - n)).reshape(rows_pad, _LANES)
        y = jnp.pad(y, (0, total - n),
                    constant_values=jnp.nan).reshape(rows_pad, _LANES)
        kernel = functools.partial(_bce_sum_kernel, inv_count=1.0 / n)
        return _reduce_loss_call(kernel, x, y, tile_rows=tile, n_scratch=1,
                                 transcendentals_per_elem=2)

    elif num_class > 2 and (not multi_label):
        # ---- multi-class cross entropy: logits (N,C), targets (N,) class ids
        n, c = logits.shape
        t = targets.reshape(n, 1)
        tile = _pick_tile_rows(n, c)
        n_pad = _ceil_to(n, tile)
        x = _pad_rows(logits, n_pad, 0)
        t = _pad_rows(t, n_pad, -1)                # -1 marks padded rows
        kernel = functools.partial(_cross_entropy_kernel, inv_count=1.0 / n)
        return _reduce_loss_call(kernel, x, t, tile_rows=tile, n_scratch=1,
                                 transcendentals_per_elem=1)

    else:
        # ---- multi-label: logits (N,C), targets (N,C) float, NaN = unlabeled
        n, c = logits.shape
        y = targets
        if not jnp.issubdtype(y.dtype, jnp.floating):
            y = y.astype(jnp.float32)
        tile = _pick_tile_rows(n, c)
        n_pad = _ceil_to(n, tile)
        x = _pad_rows(logits, n_pad, 0)
        y = _pad_rows(y, n_pad, jnp.nan)
        return _reduce_loss_call(_masked_bce_kernel, x, y, tile_rows=tile,
                                 n_scratch=2, transcendentals_per_elem=2)


# ----------------------------------------------------------------------------
# Pure-JAX references (for sanity check only)
# ----------------------------------------------------------------------------
def _ref_bce(x, y):
    l = jnp.maximum(x, 0) - x * y + jnp.log1p(jnp.exp(-jnp.abs(x)))
    return jnp.mean(l)


def _ref_ce(x, t):
    lse = jax.nn.logsumexp(x, axis=-1)
    picked = jnp.take_along_axis(x, t[:, None], axis=-1)[:, 0]
    return jnp.mean(lse - picked)


def _ref_masked_bce(x, y):
    m = y == y
    xs = jnp.where(m, x, 0.0)
    ys = jnp.where(m, y, 0.0)
    l = jnp.maximum(xs, 0) - xs * ys + jnp.log1p(jnp.exp(-jnp.abs(xs)))
    return jnp.sum(jnp.where(m, l, 0.0)) / jnp.sum(m)


if __name__ == "__main__":
    key = jax.random.PRNGKey(0)
    k1, k2, k3, k4, k5, k6 = jax.random.split(key, 6)

    N, C = 8, 16

    # --- case 1: binary (num_class=2, multi_label=False) ---------------------
    logits_bin = jax.random.normal(k1, (N, 1), jnp.float32)
    targets_bin = (jax.random.uniform(k2, (N, 1)) > 0.5).astype(jnp.float32)
    loss_bin = criterion_forward(logits_bin, targets_bin,
                                 num_class=2, multi_label=False)

    # --- case 2: multi-class (num_class>2, multi_label=False) ----------------
    logits_mc = jax.random.normal(k3, (N, C), jnp.float32)
    targets_mc = jax.random.randint(k4, (N, 1), 0, C, jnp.int32)
    loss_mc = criterion_forward(logits_mc, targets_mc,
                                num_class=C, multi_label=False)

    # --- case 3: multi-label with NaN-masked (unlabeled) targets -------------
    logits_ml = jax.random.normal(k5, (N, C), jnp.float32)
    labels_ml = (jax.random.uniform(k6, (N, C)) > 0.5).astype(jnp.float32)
    labeled = jax.random.uniform(jax.random.PRNGKey(7), (N, C)) > 0.3
    targets_ml = jnp.where(labeled, labels_ml, jnp.nan)
    loss_ml = criterion_forward(logits_ml, targets_ml,
                                num_class=C, multi_label=True)

    jax.block_until_ready((loss_bin, loss_mc, loss_ml))

    # sanity check against pure-JAX references
    assert jnp.allclose(loss_bin, _ref_bce(logits_bin, targets_bin), atol=1e-5)
    assert jnp.allclose(loss_mc, _ref_ce(logits_mc, targets_mc[:, 0]), atol=1e-5)
    assert jnp.allclose(loss_ml, _ref_masked_bce(logits_ml, targets_ml), atol=1e-5)

    print("KERNEL_OK")
</pallas_src>

<mosaic_0001>
module attributes {stable_mosaic.version = 11 : i64} {
  func.func @_bce_sum_kernel(%arg0: i32, %arg1: memref<8x128xf32, #tpu.memory_space<vmem>>, %arg2: memref<8x128xf32, #tpu.memory_space<vmem>>, %arg3: memref<1x128xf32, #tpu.memory_space<vmem>>, %arg4: memref<1x1xf32, #tpu.memory_space<smem>>) attributes {dimension_semantics = [#tpu.dimension_semantics<arbitrary>], iteration_bounds = array<i64: 1>, scalar_prefetch = 0 : i64, scratch_operands = 1 : i64, tpu.core_type = #tpu.core_type<tc>, window_params = [{transform_indices = @transform_0, window_bounds = array<i64: 8, 128>}, {transform_indices = @transform_1, window_bounds = array<i64: 8, 128>}, {pipeline_mode = #tpu.pipeline_mode<synchronous>, transform_indices = @transform_2, window_bounds = array<i64: 1, 128>}]} {
    %c0_i32 = arith.constant 0 : i32
    %0 = arith.cmpi eq, %arg0, %c0_i32 : i32
    %1 = arith.extui %0 : i1 to i32
    %c0_i32_0 = arith.constant 0 : i32
    %2 = arith.cmpi ne, %1, %c0_i32_0 : i32
    scf.if %2 {
      %cst_13 = arith.constant 0.000000e+00 : f32
      %c0_14 = arith.constant 0 : index
      %c0_15 = arith.constant 0 : index
      %28 = memref.load %arg4[%c0_14, %c0_15] : memref<1x1xf32, #tpu.memory_space<smem>>
      memref.store %cst_13, %arg4[%c0_14, %c0_15] : memref<1x1xf32, #tpu.memory_space<smem>>
    } else {
    }
    %c0 = arith.constant 0 : index
    %c0_1 = arith.constant 0 : index
    %3 = vector.load %arg1[%c0, %c0_1] : memref<8x128xf32, #tpu.memory_space<vmem>>, vector<8x128xf32>
    %c0_2 = arith.constant 0 : index
    %c0_3 = arith.constant 0 : index
    %4 = vector.load %arg2[%c0_2, %c0_3] : memref<8x128xf32, #tpu.memory_space<vmem>>, vector<8x128xf32>
    %5 = arith.cmpf oeq, %4, %4 : vector<8x128xf32>
    %cst = arith.constant 0.000000e+00 : f32
    %6 = vector.broadcast %cst : f32 to vector<8x128xf32>
    %7 = arith.maximumf %3, %6 : vector<8x128xf32>
    %8 = arith.mulf %3, %4 : vector<8x128xf32>
    %9 = arith.subf %7, %8 : vector<8x128xf32>
    %10 = math.absf %3 : vector<8x128xf32>
    %cst_4 = arith.constant 0.000000e+00 : f32
    %11 = vector.broadcast %cst_4 : f32 to vector<8x128xf32>
    %12 = arith.subf %11, %10 : vector<8x128xf32>
    %13 = math.exp %12 : vector<8x128xf32>
    %14 = math.log1p %13 : vector<8x128xf32>
    %15 = arith.addf %9, %14 : vector<8x128xf32>
    %c0_5 = arith.constant 0 : index
    %c0_6 = arith.constant 0 : index
    %16 = memref.load %arg4[%c0_5, %c0_6] : memref<1x1xf32, #tpu.memory_space<smem>>
    %cst_7 = arith.constant 0.000000e+00 : f32
    %17 = vector.broadcast %cst_7 : f32 to vector<8x128xf32>
    %18 = arith.select %5, %15, %17 : vector<8x128xi1>, vector<8x128xf32>
    %19 = vector.shape_cast %18 : vector<8x128xf32> to vector<1x8x128xf32>
    %cst_8 = arith.constant dense<0.000000e+00> : vector<1xf32>
    %20 = vector.multi_reduction <add>, %19, %cst_8 [1, 2] : vector<1x8x128xf32> to vector<1xf32>
    %21 = vector.shape_cast %20 : vector<1xf32> to vector<1x1x1xf32>
    %22 = vector.extract %21[0, 0, 0] : f32 from vector<1x1x1xf32>
    %23 = arith.addf %16, %22 : f32
    %c0_9 = arith.constant 0 : index
    %c0_10 = arith.constant 0 : index
    %24 = memref.load %arg4[%c0_9, %c0_10] : memref<1x1xf32, #tpu.memory_space<smem>>
    memref.store %23, %arg4[%c0_9, %c0_10] : memref<1x1xf32, #tpu.memory_space<smem>>
    %c0_i32_11 = arith.constant 0 : i32
    %25 = arith.cmpi eq, %arg0, %c0_i32_11 : i32
    %26 = arith.extui %25 : i1 to i32
    %c0_i32_12 = arith.constant 0 : i32
    %27 = arith.cmpi ne, %26, %c0_i32_12 : i32
    scf.if %27 {
      %c0_13 = arith.constant 0 : index
      %c0_14 = arith.constant 0 : index
      %28 = memref.load %arg4[%c0_13, %c0_14] : memref<1x1xf32, #tpu.memory_space<smem>>
      %cst_15 = arith.constant 1.250000e-01 : f32
      %29 = arith.mulf %28, %cst_15 : f32
      %30 = vector.broadcast %29 : f32 to vector<1x128xf32>
      %c0_16 = arith.constant 0 : index
      %c0_17 = arith.constant 0 : index
      %31 = vector.load %arg3[%c0_16, %c0_17] : memref<1x128xf32, #tpu.memory_space<vmem>>, vector<1x128xf32>
      tpu.vector_store %arg3[%c0_16, %c0_17], %30 {strides = array<i32>} : memref<1x128xf32, #tpu.memory_space<vmem>>, vector<1x128xf32>,
    } else {
    }
    return
  }
  func.func @transform_0(%arg0: i32) -> (i32, i32) {
    %c0_i32 = arith.constant 0 : i32
    %c0_i32_0 = arith.constant 0 : i32
    return %arg0, %c0_i32 : i32, i32
  }
  func.func @transform_1(%arg0: i32) -> (i32, i32) {
    %c0_i32 = arith.constant 0 : i32
    %c0_i32_0 = arith.constant 0 : i32
    return %arg0, %c0_i32 : i32, i32
  }
  func.func @transform_2(%arg0: i32) -> (i32, i32) {
    %c0_i32 = arith.constant 0 : i32
    %c0_i32_0 = arith.constant 0 : i32
    %c0_i32_1 = arith.constant 0 : i32
    return %c0_i32, %c0_i32_0 : i32, i32
  }
}

</mosaic_0001>

<llo_original>
// kernel: criterion_forward.1
$region0: #{criterion_forward.1}
  #allocation0 [shape = 'u32[]', space=smem, size = 0x4, offset = 0x4, fixed_abs, tag = 'smem constant byte address 0x4 - core index']
  #allocation1 [shape = 'u32[144,128]{1,0:T(1,128)}', space=vmem, size = 0x12000, scoped, tag = 'internal scratch']
  #allocation2 [shape = 'f32[1,1]{1,0:T(1,128)}', space=smem, size = 0x200, scoped, tag = 'scratch operand']
  %s0 = inlined_call_operand.vmem [shape: f32[8,128], index: 0, kind: input, shape index: {}]
  %s1 = inlined_call_operand.vmem [shape: f32[8,128], index: 1, kind: input, shape index: {}]
  %s2 = inlined_call_operand.hbm [shape: f32[1,128], index: 2, kind: output, shape index: {}]
  %s3 = sld [smem:[#allocation0]]
  $region26: #{criterion_forward.1} parent=0
    _
  %s5 = ssub.s32 1, %s3
  %s6 = scalar_select 0, %s5, %s3
  $region1: #{criterion_forward.1} parent=0
    #allocation3 [shape = 'u8[512]{0}', space=vmem, size = 0x400, scoped, tag = 'output window, operand 0, single buffered']
    #allocation4 [shape = 's32[1]{0}', space=sflag, size = 0x4, scoped, tag = 'scoped memory for criterion_forward.1']
    %7 = vsyncpa [#allocation4], 0
    // Predicated region
    $region2: #{criterion_forward.1} parent=1 // pred_check
      _
    $region3: #{criterion_forward.1} parent=1 // pred_check_branch
      %9 = sbr.rel (0) target = $region5
    $region4: #{criterion_forward.1} parent=1 // pred_region
      _
    $region5: #{criterion_forward.1} parent=1 // pred_fallthru
      _
    // Predicated region
    $region6: #{criterion_forward.1} parent=1 // pred_check
      _
    $region7: #{criterion_forward.1} parent=1 // pred_check_branch
      %11 = sbr.rel (0) target = $region9
    $region8: #{criterion_forward.1} parent=1 // pred_region
      _
    $region9: #{criterion_forward.1} parent=1 // pred_fallthru
      _
    %p12 = scmp.eq.s32.totalorder 0, 0
    // Predicated region
    $region10: #{criterion_forward.1} parent=1 // pred_check
      %p13 = pneg %p12
    $region11: #{criterion_forward.1} parent=1 // pred_check_branch
      %15 = sbr.rel (%p13) target = $region13
    $region12: #{criterion_forward.1} parent=1 // pred_region
      %s16 = scalar_lea.smem [#allocation2], 0
      %17 = sst [smem:[%s16]] 0.0
    $region13: #{criterion_forward.1} parent=1 // pred_fallthru
      _
    %v18 = vld [vmem:[%s0] sm:$0xff]
    %v19 = vld [vmem:[%s1] sm:$0xff]
    %vm20 = vcmp.eq.f32.partialorder %v19, %v19
    %v21 = vmax.f32 %v18, 0.0
    %v22 = vmul.f32 %v18, %v19
    %v23 = vsub.f32 %v21, %v22
    %v24 = vand.u32 2147483647, %v18
    %v25 = vsub.f32 0.0, %v24
    %v26 = vmul.f32 %v25, 1.442695
    %v27 = vpow.pop %v26
    %v28 = vadd.f32 %v27, 1.0
    %v29 = vlog2.pop %v28
    %v30 = vmul.f32 %v29, 0.6931472
    %v31 = vmul.f32 -0.5, %v27
    %v32 = vadd.f32 %v31, 1.0
    %v33 = vmul.f32 %v32, %v27
    %v34 = vand.u32 2147483647, %v27
    %vm35 = vcmp.lt.f32.partialorder %v34, 0.0004427343
    %v36 = vsel %vm35, %v33, %v30
    %v37 = vadd.f32 %v23, %v36
    %s38 = sld [smem:[#allocation2]]
    %v39 = vsel %vm20, %v37, 0.0
    %40 = vadd.xlane.f32.xlu0 %v39
    %v41 = vpop.xlane.xlu0 %40
    %v42 = vrot.slane %v41, 4
    %v43 = vadd.f32 %v41, %v42
    %v44 = vrot.slane %v43, 2
    %v45 = vadd.f32 %v43, %v44
    %v46 = vrot.slane %v45, 1
    %v47 = vadd.f32 %v45, %v46
    %s48 = vtos %v47
    %s49 = sadd.f32 %s38, %s48
    %s50 = scalar_lea.smem [#allocation2], 0
    %51 = sst [smem:[%s50]] %s49
    // Predicated region
    $region14: #{criterion_forward.1} parent=1 // pred_check
      %p52 = pneg %p12
    $region15: #{criterion_forward.1} parent=1 // pred_check_branch
      %54 = sbr.rel (%p52) target = $region17
    $region16: #{criterion_forward.1} parent=1 // pred_region
      %s55 = sld [smem:[#allocation2]]
      %s56 = smul.f32 %s55, 0.125
      %v57 = vstv %s56
      %58 = vst [vmem:[#allocation3] sm:$0x1] %v57
    $region17: #{criterion_forward.1} parent=1 // pred_fallthru
      _
    // Predicated region
    $region18: #{criterion_forward.1} parent=1 // pred_check
      _
    $region19: #{criterion_forward.1} parent=1 // pred_check_branch
      %60 = sbr.rel (0) target = $region21
    $region20: #{criterion_forward.1} parent=1 // pred_region
      %s62 = ssub.s32 16, 16
      %63 = vsyncadd [#allocation4], %s62
      %s65 = sshll.u32 [#allocation3], 4
      %s66 = int_to_ptr.vmem [resolvable:$true] %s65
      %68 = dma.vmem_to_hbm [thread:$0]  %s66, 16, %s2, [#allocation4]
    $region21: #{criterion_forward.1} parent=1 // pred_fallthru
      _
    // Predicated region
    $region22: #{criterion_forward.1} parent=1 // pred_check
      _
    $region23: #{criterion_forward.1} parent=1 // pred_check_branch
      %70 = sbr.rel (0) target = $region25
    $region24: #{criterion_forward.1} parent=1 // pred_region
      %71 = dma.done [#allocation4], 16
    $region25: #{criterion_forward.1} parent=1 // pred_fallthru
      _
    %72 = vsyncpa [#allocation4], 1

</llo_original>
